<compile_context>
chip_gen: v7x
topology: tpu7x:2x2x1
jax: 0.10.0
libtpu: 0.0.40
codegen_flags: <defaults>
</compile_context>

<pallas_src>
import jax
import jax.numpy as jnp
from jax.experimental import pallas as pl
from jax.experimental.pallas import tpu as pltpu


def _alpha_attention_kernel(g_ref, w_ref, out_ref):
    # g_ref  : (BB, T, H)  VMEM tile holding BB batch rows
    # w_ref  : (1, H)      lane-dense projection weight (constant block index)
    # out_ref: (1, BB, T)  lane-dense attention weights for this batch block
    g = g_ref[...].astype(jnp.float32)            # (BB, T, H)
    w = w_ref[...].astype(jnp.float32)            # (1, H)

    # Projection: weighted row-sum over H (VPU multiply + lane reduction).
    # Bias omitted: softmax over T is invariant to a constant shift.
    scores = jnp.sum(g * w[None, :, :], axis=-1)  # (BB, T), f32

    # Softmax over the sequence axis (last / lane axis in this layout).
    m = jnp.max(scores, axis=-1, keepdims=True)
    e = jnp.exp(scores - m)
    denom = jnp.sum(e, axis=-1, keepdims=True)
    # Exact reciprocal: the divide is off the critical path of this
    # memory-bound kernel and keeps full f32 accuracy.
    alpha = e * pl.reciprocal(denom, approx=False)

    out_ref[0] = alpha.astype(out_ref.dtype)


def _pick_batch_block(B, T, H, in_itemsize, budget_bytes):
    """Largest batch block whose double-buffered slabs fit the VMEM budget."""
    # Double-buffered input slab + double-buffered f32 output block, per row.
    per_b = 2 * T * H * in_itemsize + 2 * T * 4
    max_bb = max(1, budget_bytes // per_b)
    if max_bb >= B:
        # Prefer >= 2 grid steps (feeds both v7x TensorCores) when each half
        # is still a sizeable DMA slab; otherwise take the batch in one step.
        if B % 2 == 0 and (B // 2) * per_b >= (1 << 20):
            return B // 2
        return B
    divisors = [d for d in range(1, B + 1) if B % d == 0 and d <= max_bb]
    mult8 = [d for d in divisors if d % 8 == 0]
    return max(mult8) if mult8 else max(divisors)


def alpha_attention(g, weight, bias=None, *, vmem_budget_bytes=20 << 20):
    """g: (B, T, H); weight: (1, H) (nn.Linear layout); bias: (1,) (unused —
    softmax over T is shift-invariant).  Returns alpha: (B, T, 1)."""
    B, T, H = g.shape
    del bias  # Mathematically a no-op under the T-softmax.
    w_row = weight.reshape(1, H)

    bb = _pick_batch_block(B, T, H, g.dtype.itemsize, vmem_budget_bytes)
    nb = B // bb

    out = pl.pallas_call(
        _alpha_attention_kernel,
        out_shape=jax.ShapeDtypeStruct((nb, bb, T), g.dtype),
        grid_spec=pltpu.PrefetchScalarGridSpec(
            num_scalar_prefetch=0,
            grid=(nb,),
            in_specs=[
                pl.BlockSpec((bb, T, H), lambda b: (b, 0, 0)),
                pl.BlockSpec((1, H), lambda b: (0, 0)),
            ],
            out_specs=pl.BlockSpec((1, bb, T), lambda b: (b, 0, 0)),
        ),
        compiler_params=pltpu.CompilerParams(
            dimension_semantics=("parallel",),
            vmem_limit_bytes=32 << 20,
        ),
    )(g, w_row)

    # TODO(synk): for very large T*H (beyond the v7x VMEM budget even at
    # bb=1), add a T-tiling grid axis with an online softmax.
    # Lane-dense (nb, bb, T) -> PyTorch layout (B, T, 1).
    return out.reshape(B, T, 1)


if __name__ == "__main__":
    B, T, H = 2, 8, 32

    key = jax.random.PRNGKey(0)
    kg, kw, kb = jax.random.split(key, 3)

    # nn.Linear(hidden_dim, 1): weight (1, H), bias (1,).
    bound = 1.0 / jnp.sqrt(H)
    g = jax.random.normal(kg, (B, T, H), dtype=jnp.float32)
    weight = jax.random.uniform(kw, (1, H), minval=-bound, maxval=bound,
                                dtype=jnp.float32)
    bias = jax.random.uniform(kb, (1,), minval=-bound, maxval=bound,
                              dtype=jnp.float32)

    alpha = jax.block_until_ready(alpha_attention(g, weight, bias))

    # Pure-JAX reference (bias included; the T-softmax makes it a no-op).
    proj = jnp.einsum("bth,oh->bto", g, weight) + bias
    ref = jax.nn.softmax(proj, axis=-2)

    assert alpha.shape == (B, T, 1)
    assert jnp.allclose(alpha, ref, atol=1e-5, rtol=1e-5), (
        f"max abs diff {jnp.max(jnp.abs(alpha - ref))}")

    print("KERNEL_OK")
</pallas_src>

<mosaic_0001>
module attributes {stable_mosaic.version = 11 : i64} {
  func.func @_alpha_attention_kernel(%arg0: i32, %arg1: memref<2x8x32xf32, #tpu.memory_space<vmem>>, %arg2: memref<1x32xf32, #tpu.memory_space<vmem>>, %arg3: memref<1x2x8xf32, #tpu.memory_space<vmem>>) attributes {dimension_semantics = [#tpu.dimension_semantics<parallel>], iteration_bounds = array<i64: 1>, scalar_prefetch = 0 : i64, scratch_operands = 0 : i64, tpu.core_type = #tpu.core_type<tc>, window_params = [{transform_indices = @transform_0, window_bounds = array<i64: 2, 8, 32>}, {pipeline_mode = #tpu.pipeline_mode<synchronous>, transform_indices = @transform_1, window_bounds = array<i64: 1, 32>}, {transform_indices = @transform_2, window_bounds = array<i64: 1, 2, 8>}]} {
    %c0 = arith.constant 0 : index
    %c0_0 = arith.constant 0 : index
    %c0_1 = arith.constant 0 : index
    %0 = vector.load %arg1[%c0, %c0_0, %c0_1] : memref<2x8x32xf32, #tpu.memory_space<vmem>>, vector<2x8x32xf32>
    %c0_2 = arith.constant 0 : index
    %c0_3 = arith.constant 0 : index
    %1 = vector.load %arg2[%c0_2, %c0_3] : memref<1x32xf32, #tpu.memory_space<vmem>>, vector<1x32xf32>
    %2 = vector.shape_cast %1 : vector<1x32xf32> to vector<1x1x32xf32>
    %3 = vector.broadcast %2 : vector<1x1x32xf32> to vector<2x8x32xf32>
    %4 = arith.mulf %0, %3 : vector<2x8x32xf32>
    %cst = arith.constant dense<0.000000e+00> : vector<2x8xf32>
    %5 = vector.multi_reduction <add>, %4, %cst [2] : vector<2x8x32xf32> to vector<2x8xf32>
    %cst_4 = arith.constant dense<0xFF800000> : vector<2xf32>
    %6 = vector.multi_reduction <maximumf>, %5, %cst_4 [1] : vector<2x8xf32> to vector<2xf32>
    %7 = vector.shape_cast %6 : vector<2xf32> to vector<2x1xf32>
    %8 = vector.broadcast %7 : vector<2x1xf32> to vector<2x8xf32>
    %9 = arith.subf %5, %8 : vector<2x8xf32>
    %10 = math.exp %9 : vector<2x8xf32>
    %cst_5 = arith.constant dense<0.000000e+00> : vector<2xf32>
    %11 = vector.multi_reduction <add>, %10, %cst_5 [1] : vector<2x8xf32> to vector<2xf32>
    %12 = vector.shape_cast %11 : vector<2xf32> to vector<2x1xf32>
    %13 = tpu.reciprocal %12 : vector<2x1xf32> -> vector<2x1xf32>
    %14 = vector.broadcast %13 : vector<2x1xf32> to vector<2x8xf32>
    %15 = arith.mulf %10, %14 : vector<2x8xf32>
    %c0_6 = arith.constant 0 : index
    %c0_7 = arith.constant 0 : index
    %c0_8 = arith.constant 0 : index
    %16 = vector.load %arg3[%c0_6, %c0_7, %c0_8] : memref<1x2x8xf32, #tpu.memory_space<vmem>>, vector<1x2x8xf32>
    %17 = vector.shape_cast %16 : vector<1x2x8xf32> to vector<2x8xf32>
    %18 = vector.shape_cast %15 : vector<2x8xf32> to vector<1x2x8xf32>
    tpu.vector_store %arg3[%c0_6, %c0_7, %c0_8], %18 {strides = array<i32>} : memref<1x2x8xf32, #tpu.memory_space<vmem>>, vector<1x2x8xf32>,
    return
  }
  func.func @transform_0(%arg0: i32) -> (i32, i32, i32) {
    %c0_i32 = arith.constant 0 : i32
    %c0_i32_0 = arith.constant 0 : i32
    %c0_i32_1 = arith.constant 0 : i32
    return %arg0, %c0_i32, %c0_i32_0 : i32, i32, i32
  }
  func.func @transform_1(%arg0: i32) -> (i32, i32) {
    %c0_i32 = arith.constant 0 : i32
    %c0_i32_0 = arith.constant 0 : i32
    %c0_i32_1 = arith.constant 0 : i32
    return %c0_i32, %c0_i32_0 : i32, i32
  }
  func.func @transform_2(%arg0: i32) -> (i32, i32, i32) {
    %c0_i32 = arith.constant 0 : i32
    %c0_i32_0 = arith.constant 0 : i32
    %c0_i32_1 = arith.constant 0 : i32
    return %arg0, %c0_i32, %c0_i32_0 : i32, i32, i32
  }
}

</mosaic_0001>

<llo_original>
// kernel: tpu_custom_call.1
$region0: #{tpu_custom_call.1}
  #allocation0 [shape = 'u32[]', space=smem, size = 0x4, offset = 0x4, fixed_abs, tag = 'smem constant byte address 0x4 - core index']
  #allocation1 [shape = 'u32[144,128]{1,0:T(1,128)}', space=vmem, size = 0x12000, scoped, tag = 'internal scratch']
  %s0 = inlined_call_operand.hbm [shape: f32[2,8,32], index: 0, kind: input, shape index: {}]
  %s1 = inlined_call_operand.vmem [shape: f32[1,32], index: 1, kind: input, shape index: {}]
  %s2 = inlined_call_operand.hbm [shape: f32[1,2,8], index: 2, kind: output, shape index: {}]
  %s3 = sld [smem:[#allocation0]]
  $region22: #{tpu_custom_call.1} parent=0
    _
  %s5 = ssub.s32 1, %s3
  %s6 = scalar_select 0, %s5, %s3
  $region1: #{tpu_custom_call.1} parent=0
    #allocation2 [shape = 'u8[8192]{0}', space=vmem, size = 0x2000, scoped, tag = 'input window, operand 0, single buffered']
    #allocation3 [shape = 's32[1]{0}', space=sflag, size = 0x4, scoped, tag = 'scoped memory for tpu_custom_call.1']
    #allocation4 [shape = 's32[1]{0}', space=sflag, size = 0x4, scoped, tag = 'scoped memory for tpu_custom_call.1']
    #allocation5 [shape = 'u8[1024]{0}', space=vmem, size = 0x400, scoped, tag = 'output window, operand 0, single buffered']
    %7 = vsyncpa [#allocation3], 0
    %8 = vsyncpa [#allocation4], 0
    // Predicated region
    $region2: #{tpu_custom_call.1} parent=1 // pred_check
      _
    $region3: #{tpu_custom_call.1} parent=1 // pred_check_branch
      %10 = sbr.rel (0) target = $region5
    $region4: #{tpu_custom_call.1} parent=1 // pred_region
      %s12 = ssub.s32 256, 256
      %13 = vsyncadd [#allocation3], %s12
      %s14 = sshll.u32 [#allocation2], 4
      %s15 = int_to_ptr.vmem [resolvable:$true] %s14
      %20 = dma.hbm_to_vmem [thread:$0]  %s0, 256, %s15, [#allocation3], 128, 128, 8
    $region5: #{tpu_custom_call.1} parent=1 // pred_fallthru
      _
    // Predicated region
    $region6: #{tpu_custom_call.1} parent=1 // pred_check
      _
    $region7: #{tpu_custom_call.1} parent=1 // pred_check_branch
      %22 = sbr.rel (0) target = $region9
    $region8: #{tpu_custom_call.1} parent=1 // pred_region
      _
    $region9: #{tpu_custom_call.1} parent=1 // pred_fallthru
      _
    // Predicated region
    $region10: #{tpu_custom_call.1} parent=1 // pred_check
      _
    $region11: #{tpu_custom_call.1} parent=1 // pred_check_branch
      %24 = sbr.rel (0) target = $region13
    $region12: #{tpu_custom_call.1} parent=1 // pred_region
      %25 = dma.done [#allocation3], 256
    $region13: #{tpu_custom_call.1} parent=1 // pred_fallthru
      _
    %v26 = vld [vmem:[#allocation2] sm:$0xff]
    %v27 = vld [vmem:[#allocation2 + $0x8] sm:$0xff]
    %v28 = vld [vmem:[%s1] sm:$0x1]
    %v30 = vlaneseq
    %v31 = vshrl.u32 %v30, 7
    %v32 = vsub.s32 0, %v31
    %v33 = vrot.slane %v28, %v32
    %v35 = vmul.f32 %v26, %v33
    %v36 = vmul.f32 %v27, %v33
    %vm37 = vcmask 261120
    %v38 = vsel %vm37, %v35, 0.0
    %39 = vadd.xlane.f32.xlu0 %v38
    %v40 = vpop.xlane.xlu0 %39
    %v41 = vsel %vm37, %v36, 0.0
    %42 = vadd.xlane.f32.xlu0 %v41
    %v43 = vpop.xlane.xlu0 %42
    %v46 = vlaneseq
    %v47 = vand.u32 %v46, 127
    %v48 = vlaneseq
    %v49 = vshrl.u32 %v48, 7
    %v50 = vsub.s32 %v47, %v49
    %v51 = vrot.slane %v40, %v50
    %v52 = vlaneseq
    %v53 = vshrl.u32 %v52, 7
    %v54 = vsub.s32 %v47, %v53
    %v55 = vrot.slane %v43, %v54
    %vm56 = vcmask 1041409
    %v57 = vsel %vm56, %v55, %v51
    %vm59 = vcmask 58368
    %v60 = vsel %vm59, %v57, -inf
    %61 = vmax.xlane.f32.xlu0 %v60
    %v62 = vpop.xlane.xlu0 %61
    %v64 = vlaneseq
    %v65 = vshrl.u32 %v64, 7
    %v66 = vsub.s32 0, %v65
    %v67 = vrot.slane %v62, %v66
    %v68 = vlaneseq
    %v69 = vshrl.u32 %v68, 7
    %v70 = vsub.s32 1, %v69
    %v71 = vrot.slane %v62, %v70
    %v74 = vsub.f32 %v40, %v67
    %v75 = vsub.f32 %v43, %v71
    %v76 = vmul.f32 %v74, 1.442695
    %v77 = vpow.pop %v76
    %v78 = vmul.f32 %v75, 1.442695
    %v79 = vpow.pop %v78
    %82 = vset.pattern.permute.xlu0 0
    %83 = vperm.xlu0 %82, %v77
    %v84 = vpop.permute.xlu0 %83
    %85 = vset.pattern.permute.xlu0 0
    %86 = vperm.xlu0 %85, %v79
    %v87 = vpop.permute.xlu0 %86
    %v88 = vlaneseq
    %v89 = vshrl.u32 %v88, 7
    %v90 = vsub.s32 %v47, %v89
    %v91 = vrot.slane %v84, %v90
    %v92 = vlaneseq
    %v93 = vshrl.u32 %v92, 7
    %v94 = vsub.s32 %v47, %v93
    %v95 = vrot.slane %v87, %v94
    %v96 = vsel %vm56, %v95, %v91
    %v98 = vsel %vm59, %v96, 0.0
    %99 = vadd.xlane.f32.xlu0 %v98
    %v100 = vpop.xlane.xlu0 %99
    %v101 = vrcp.pop %v100
    %v103 = vlaneseq
    %v104 = vshrl.u32 %v103, 7
    %v105 = vsub.s32 0, %v104
    %v106 = vrot.slane %v101, %v105
    %v107 = vlaneseq
    %v108 = vshrl.u32 %v107, 7
    %v109 = vsub.s32 1, %v108
    %v110 = vrot.slane %v101, %v109
    %v113 = vmul.f32 %v77, %v106
    %v114 = vmul.f32 %v79, %v110
    %117 = vset.pattern.permute.xlu0 0
    %118 = vperm.xlu0 %117, %v113
    %v119 = vpop.permute.xlu0 %118
    %120 = vset.pattern.permute.xlu0 0
    %121 = vperm.xlu0 %120, %v114
    %v122 = vpop.permute.xlu0 %121
    %v123 = vlaneseq
    %v124 = vshrl.u32 %v123, 7
    %v125 = vsub.s32 %v47, %v124
    %v126 = vrot.slane %v119, %v125
    %v127 = vlaneseq
    %v128 = vshrl.u32 %v127, 7
    %v129 = vsub.s32 %v47, %v128
    %v130 = vrot.slane %v122, %v129
    %v131 = vsel %vm56, %v130, %v126
    %133 = vst.msk [vmem:[#allocation5] sm:$0x3] %vm59, %v131
    // Predicated region
    $region14: #{tpu_custom_call.1} parent=1 // pred_check
      _
    $region15: #{tpu_custom_call.1} parent=1 // pred_check_branch
      %135 = sbr.rel (0) target = $region17
    $region16: #{tpu_custom_call.1} parent=1 // pred_region
      %s137 = ssub.s32 32, 32
      %138 = vsyncadd [#allocation4], %s137
      %s140 = sshll.u32 [#allocation5], 4
      %s141 = int_to_ptr.vmem [resolvable:$true] %s140
      %143 = dma.vmem_to_hbm [thread:$0]  %s141, 32, %s2, [#allocation4]
    $region17: #{tpu_custom_call.1} parent=1 // pred_fallthru
      _
    // Predicated region
    $region18: #{tpu_custom_call.1} parent=1 // pred_check
      _
    $region19: #{tpu_custom_call.1} parent=1 // pred_check_branch
      %145 = sbr.rel (0) target = $region21
    $region20: #{tpu_custom_call.1} parent=1 // pred_region
      %146 = dma.done [#allocation4], 32
    $region21: #{tpu_custom_call.1} parent=1 // pred_fallthru
      _
    %147 = vsyncpa [#allocation3], 1
    %148 = vsyncpa [#allocation4], 1

</llo_original>
